<compile_context>
chip_gen: v7x
topology: tpu7x:2x2x1
jax: 0.10.0
libtpu: 0.0.40
codegen_flags: <defaults>
</compile_context>

<pallas_src>
import functools

import jax
import jax.numpy as jnp
from jax.experimental import pallas as pl
from jax.experimental.pallas import tpu as pltpu


def _round_up(x: int, m: int) -> int:
    return (x + m - 1) // m * m


def _choose_tm(batch: int, max_tile: int) -> int:
    """Batch tile (lane axis) — multiple of 128, large, but >= 2 grid steps when possible."""
    b128 = _round_up(batch, 128)
    if b128 <= 128:
        return 128
    half = _round_up(b128 // 2, 128)  # guarantee >= 2 steps -> megacore / v7x 2-TC sharding
    return max(128, min(max_tile, half))


def concept_branch_kernel(xt_ref, w1t_ref, b1_ref, w2t_ref, b2_ref, ot_ref):
    # fc1 (transposed): h_t[H, TM] = W1^T[H, E] @ x^T[E, TM], f32 accumulation on the MXU.
    h_t = jnp.dot(w1t_ref[...], xt_ref[...], preferred_element_type=jnp.float32)
    h_t = jnp.maximum(h_t + b1_ref[...], 0.0)                      # (H, TM) f32 epilogue

    # fc2 (transposed): logits_t[O, TM] = W2^T[O, H] @ h_t[H, TM].
    logits = jnp.dot(w2t_ref[...], h_t.astype(w2t_ref.dtype),
                     preferred_element_type=jnp.float32)
    logits = logits + b2_ref[...]                                   # (O, TM) f32

    # Softmax over the out_dim (sublane) axis. Exact normalization: the divide is
    # only on the (1, TM) denominator, then a broadcast multiply over 8 sublanes.
    m = jnp.max(logits, axis=0, keepdims=True)                      # (1, TM)
    e = jnp.exp(logits - m)
    denom = jnp.sum(e, axis=0, keepdims=True)                       # (1, TM)
    ot_ref[...] = (e * (1.0 / denom)).astype(ot_ref.dtype)


def prepare_concept_branch_params(w1, b1, w2, b2, matmul_dtype=jnp.bfloat16):
    """One-time weight prep (hoisted out of the per-call path).

    w1: (E, H); b1: (H,); w2: (H, O); b2: (O,).
    """
    H = w1.shape[1]
    O = w2.shape[1]
    return {
        "w1t": jnp.asarray(w1).T.astype(matmul_dtype),              # (H, E)
        "b1": jnp.asarray(b1, jnp.float32).reshape(H, 1),            # (H, 1)
        "w2t": jnp.asarray(w2).T.astype(matmul_dtype),              # (O, H)
        "b2": jnp.asarray(b2, jnp.float32).reshape(O, 1),            # (O, 1)
    }


def concept_branch(x, params, *, max_block_b=1024):
    """x: (B, E) f32 -> softmax probabilities (B, out_dim) f32."""
    B, E = x.shape
    w1t, b1, w2t, b2 = params["w1t"], params["b1"], params["w2t"], params["b2"]
    H, O = w1t.shape[0], w2t.shape[0]
    assert w1t.shape == (H, E) and w2t.shape == (O, H)

    TM = _choose_tm(B, max_block_b)
    B_pad = _round_up(B, TM)

    # (E, B_pad) bf16 input stream (cast + transpose + pad fuse into one XLA pass).
    xt = x.astype(w1t.dtype).T
    if B_pad != B:
        xt = jnp.pad(xt, ((0, 0), (0, B_pad - B)))

    grid = (B_pad // TM,)

    cost = pl.CostEstimate(
        flops=2 * B_pad * (E * H + H * O),
        transcendentals=B_pad * O,
        bytes_accessed=int(
            xt.size * xt.dtype.itemsize
            + w1t.size * w1t.dtype.itemsize
            + w2t.size * w2t.dtype.itemsize
            + 4 * (H + O)                  # biases (f32)
            + 4 * O * B_pad                # output (f32), lane-dense, unpadded lanes
        ),
    )

    out_t = pl.pallas_call(
        concept_branch_kernel,
        out_shape=jax.ShapeDtypeStruct((O, B_pad), jnp.float32),
        grid=grid,
        in_specs=[
            pl.BlockSpec((E, TM), lambda i: (0, i)),   # x^T tile, streamed over batch
            pl.BlockSpec((H, E), lambda i: (0, 0)),    # W1^T resident
            pl.BlockSpec((H, 1), lambda i: (0, 0)),    # b1 resident
            pl.BlockSpec((O, H), lambda i: (0, 0)),    # W2^T resident
            pl.BlockSpec((O, 1), lambda i: (0, 0)),    # b2 resident
        ],
        out_specs=pl.BlockSpec((O, TM), lambda i: (0, i)),
        compiler_params=pltpu.CompilerParams(dimension_semantics=("parallel",)),
        cost_estimate=cost,
    )(xt, w1t, b1, w2t, b2)

    return out_t[:, :B].T


def concept_branch_ref(x, w1, b1, w2, b2, matmul_dtype=jnp.float32):
    xb = x.astype(matmul_dtype)
    h = jnp.maximum(
        jnp.dot(xb, w1.astype(matmul_dtype), preferred_element_type=jnp.float32) + b1, 0.0)
    logits = jnp.dot(h.astype(matmul_dtype), w2.astype(matmul_dtype),
                     preferred_element_type=jnp.float32) + b2
    return jax.nn.softmax(logits, axis=-1)


if __name__ == "__main__":
    # Shapes consistent with the module: embedding_dim=64, hidden=32, out_dim=8.
    # B=200 exercises multi-step batch tiling (2 tiles of 128) + partial-tile padding.
    B, E, H, O = 200, 64, 32, 8

    key = jax.random.PRNGKey(0)
    kx, kw1, kb1, kw2, kb2 = jax.random.split(key, 5)

    x = jax.random.normal(kx, (B, E), dtype=jnp.float32)
    w1 = jax.random.uniform(kw1, (E, H), jnp.float32, -1.0 / jnp.sqrt(E), 1.0 / jnp.sqrt(E))
    b1 = jax.random.uniform(kb1, (H,), jnp.float32, -1.0 / jnp.sqrt(E), 1.0 / jnp.sqrt(E))
    w2 = jax.random.uniform(kw2, (H, O), jnp.float32, -1.0 / jnp.sqrt(H), 1.0 / jnp.sqrt(H))
    b2 = jax.random.uniform(kb2, (O,), jnp.float32, -1.0 / jnp.sqrt(H), 1.0 / jnp.sqrt(H))

    # One-time weight preparation, then a jitted per-call path.
    params = prepare_concept_branch_params(w1, b1, w2, b2)
    run = jax.jit(functools.partial(concept_branch, max_block_b=1024))

    out = jax.block_until_ready(run(x, params))
    assert out.shape == (B, O)

    # Tight check vs a reference using the same bf16 matmul inputs.
    ref_bf16 = concept_branch_ref(x, w1, b1, w2, b2, matmul_dtype=jnp.bfloat16)
    assert jnp.allclose(out, ref_bf16, atol=2e-3, rtol=2e-3), "mismatch vs bf16 reference"

    # Sanity check vs the full-f32 PyTorch-equivalent math (bf16 inputs -> looser tol).
    ref_f32 = concept_branch_ref(x, w1, b1, w2, b2, matmul_dtype=jnp.float32)
    assert jnp.allclose(out, ref_f32, atol=3e-2, rtol=3e-2), "mismatch vs f32 reference"

    # Exact normalization now -> rows sum to 1 to f32 precision.
    assert jnp.allclose(jnp.sum(out, axis=-1), 1.0, atol=1e-4), "softmax rows must sum to 1"

    print("KERNEL_OK")
</pallas_src>

<mosaic_0001>
module attributes {stable_mosaic.version = 11 : i64} {
  func.func @concept_branch_kernel(%arg0: i32, %arg1: memref<64x128xbf16, #tpu.memory_space<vmem>>, %arg2: memref<32x64xbf16, #tpu.memory_space<vmem>>, %arg3: memref<32x1xf32, #tpu.memory_space<vmem>>, %arg4: memref<8x32xbf16, #tpu.memory_space<vmem>>, %arg5: memref<8x1xf32, #tpu.memory_space<vmem>>, %arg6: memref<8x128xf32, #tpu.memory_space<vmem>>) attributes {dimension_semantics = [#tpu.dimension_semantics<parallel>], iteration_bounds = array<i64: 2>, scalar_prefetch = 0 : i64, scratch_operands = 0 : i64, tpu.core_type = #tpu.core_type<tc>, window_params = [{transform_indices = @transform_0, window_bounds = array<i64: 64, 128>}, {pipeline_mode = #tpu.pipeline_mode<synchronous>, transform_indices = @transform_1, window_bounds = array<i64: 32, 64>}, {pipeline_mode = #tpu.pipeline_mode<synchronous>, transform_indices = @transform_2, window_bounds = array<i64: 32, 1>}, {pipeline_mode = #tpu.pipeline_mode<synchronous>, transform_indices = @transform_3, window_bounds = array<i64: 8, 32>}, {pipeline_mode = #tpu.pipeline_mode<synchronous>, transform_indices = @transform_4, window_bounds = array<i64: 8, 1>}, {transform_indices = @transform_5, window_bounds = array<i64: 8, 128>}]} {
    %c0 = arith.constant 0 : index
    %c0_0 = arith.constant 0 : index
    %0 = vector.load %arg2[%c0, %c0_0] : memref<32x64xbf16, #tpu.memory_space<vmem>>, vector<32x64xbf16>
    %c0_1 = arith.constant 0 : index
    %c0_2 = arith.constant 0 : index
    %1 = vector.load %arg1[%c0_1, %c0_2] : memref<64x128xbf16, #tpu.memory_space<vmem>>, vector<64x128xbf16>
    %cst = arith.constant dense<0.000000e+00> : vector<32x128xf32>
    %2 = tpu.matmul %0, %1, %cst {dimension_numbers = #tpu.dot_dimension_numbers<[1], [0], [0], [1], [0, 0, 1, 1], [], []>} : vector<32x64xbf16>, vector<64x128xbf16>, vector<32x128xf32> -> vector<32x128xf32>
    %c0_3 = arith.constant 0 : index
    %c0_4 = arith.constant 0 : index
    %3 = vector.load %arg3[%c0_3, %c0_4] : memref<32x1xf32, #tpu.memory_space<vmem>>, vector<32x1xf32>
    %4 = vector.broadcast %3 : vector<32x1xf32> to vector<32x128xf32>
    %5 = arith.addf %2, %4 : vector<32x128xf32>
    %cst_5 = arith.constant 0.000000e+00 : f32
    %6 = vector.broadcast %cst_5 : f32 to vector<32x128xf32>
    %7 = arith.maximumf %5, %6 : vector<32x128xf32>
    %c0_6 = arith.constant 0 : index
    %c0_7 = arith.constant 0 : index
    %8 = vector.load %arg4[%c0_6, %c0_7] : memref<8x32xbf16, #tpu.memory_space<vmem>>, vector<8x32xbf16>
    %9 = arith.truncf %7 : vector<32x128xf32> to vector<32x128xbf16>
    %cst_8 = arith.constant dense<0.000000e+00> : vector<8x128xf32>
    %10 = tpu.matmul %8, %9, %cst_8 {dimension_numbers = #tpu.dot_dimension_numbers<[1], [0], [0], [1], [0, 0, 1, 1], [], []>} : vector<8x32xbf16>, vector<32x128xbf16>, vector<8x128xf32> -> vector<8x128xf32>
    %c0_9 = arith.constant 0 : index
    %c0_10 = arith.constant 0 : index
    %11 = vector.load %arg5[%c0_9, %c0_10] : memref<8x1xf32, #tpu.memory_space<vmem>>, vector<8x1xf32>
    %12 = vector.broadcast %11 : vector<8x1xf32> to vector<8x128xf32>
    %13 = arith.addf %10, %12 : vector<8x128xf32>
    %cst_11 = arith.constant dense<0xFF800000> : vector<128xf32>
    %14 = vector.multi_reduction <maximumf>, %13, %cst_11 [0] : vector<8x128xf32> to vector<128xf32>
    %15 = vector.shape_cast %14 : vector<128xf32> to vector<1x128xf32>
    %16 = vector.broadcast %15 : vector<1x128xf32> to vector<8x128xf32>
    %17 = arith.subf %13, %16 : vector<8x128xf32>
    %18 = math.exp %17 : vector<8x128xf32>
    %cst_12 = arith.constant dense<0.000000e+00> : vector<128xf32>
    %19 = vector.multi_reduction <add>, %18, %cst_12 [0] : vector<8x128xf32> to vector<128xf32>
    %20 = vector.shape_cast %19 : vector<128xf32> to vector<1x128xf32>
    %cst_13 = arith.constant 1.000000e+00 : f32
    %21 = vector.broadcast %cst_13 : f32 to vector<1x128xf32>
    %22 = arith.divf %21, %20 : vector<1x128xf32>
    %23 = vector.broadcast %22 : vector<1x128xf32> to vector<8x128xf32>
    %24 = arith.mulf %18, %23 : vector<8x128xf32>
    %c0_14 = arith.constant 0 : index
    %c0_15 = arith.constant 0 : index
    %25 = vector.load %arg6[%c0_14, %c0_15] : memref<8x128xf32, #tpu.memory_space<vmem>>, vector<8x128xf32>
    tpu.vector_store %arg6[%c0_14, %c0_15], %24 {strides = array<i32>} : memref<8x128xf32, #tpu.memory_space<vmem>>, vector<8x128xf32>,
    return
  }
  func.func @transform_0(%arg0: i32) -> (i32, i32) {
    %c0_i32 = arith.constant 0 : i32
    %c0_i32_0 = arith.constant 0 : i32
    return %c0_i32, %arg0 : i32, i32
  }
  func.func @transform_1(%arg0: i32) -> (i32, i32) {
    %c0_i32 = arith.constant 0 : i32
    %c0_i32_0 = arith.constant 0 : i32
    %c0_i32_1 = arith.constant 0 : i32
    return %c0_i32, %c0_i32_0 : i32, i32
  }
  func.func @transform_2(%arg0: i32) -> (i32, i32) {
    %c0_i32 = arith.constant 0 : i32
    %c0_i32_0 = arith.constant 0 : i32
    %c0_i32_1 = arith.constant 0 : i32
    return %c0_i32, %c0_i32_0 : i32, i32
  }
  func.func @transform_3(%arg0: i32) -> (i32, i32) {
    %c0_i32 = arith.constant 0 : i32
    %c0_i32_0 = arith.constant 0 : i32
    %c0_i32_1 = arith.constant 0 : i32
    return %c0_i32, %c0_i32_0 : i32, i32
  }
  func.func @transform_4(%arg0: i32) -> (i32, i32) {
    %c0_i32 = arith.constant 0 : i32
    %c0_i32_0 = arith.constant 0 : i32
    %c0_i32_1 = arith.constant 0 : i32
    return %c0_i32, %c0_i32_0 : i32, i32
  }
  func.func @transform_5(%arg0: i32) -> (i32, i32) {
    %c0_i32 = arith.constant 0 : i32
    %c0_i32_0 = arith.constant 0 : i32
    return %c0_i32, %arg0 : i32, i32
  }
}

</mosaic_0001>

<llo_original>
// kernel: concept_branch.1
$region0: #{concept_branch.1}
  #allocation0 [shape = 'u32[]', space=smem, size = 0x4, offset = 0x4, fixed_abs, tag = 'smem constant byte address 0x4 - core index']
  #allocation1 [shape = 'u32[144,128]{1,0:T(1,128)}', space=vmem, size = 0x12000, scoped, tag = 'internal scratch']
  %s0 = inlined_call_operand.vmem [shape: bf16[64,256], index: 0, kind: input, shape index: {}]
  %s1 = inlined_call_operand.vmem [shape: bf16[32,64], index: 1, kind: input, shape index: {}]
  %s2 = inlined_call_operand.vmem [shape: f32[32,1], index: 2, kind: input, shape index: {}]
  %s3 = inlined_call_operand.vmem [shape: bf16[8,32], index: 3, kind: input, shape index: {}]
  %s4 = inlined_call_operand.vmem [shape: f32[8,1], index: 4, kind: input, shape index: {}]
  %s5 = inlined_call_operand.vmem [shape: f32[8,256], index: 5, kind: output, shape index: {}]
  %s6 = sld [smem:[#allocation0]]
  $region94: #{concept_branch.1} parent=0
    _
  %s8 = ssub.s32 1, %s6
  %s9 = scalar_select 0, %s8, %s6
  $region1: #{concept_branch.1} parent=0
    #allocation2 [shape = 'u8[32768]{0}', space=vmem, size = 0x8000, scoped, tag = 'input window, operand 0']
    loop: start=0, step=1, limit=4
    $region2: #{concept_branch.1} parent=1 // loop_pre_header
      _
    $region3: #{concept_branch.1} parent=1 // loop_header
      %s11 = sphi 0, %s15
      %p12 = scmp.ge.s32.totalorder %s11, 4
      %s21 = sphi 0, %s23
      %s24 = sphi 0, %s21
      %s25 = sphi 0, %s24
      %s41 = sphi 0, %s25
      %s45 = sphi 0, %s45
      %s47 = sphi 0, %s45
      %s48 = sphi 0, %s47
      %s62 = sphi 0, %s48
      %s66 = sphi 0, %s66
      %s68 = sphi 0, %s66
      %s69 = sphi 0, %s68
      %s83 = sphi 0, %s69
      %s87 = sphi 0, %s87
      %s89 = sphi 0, %s87
      %s90 = sphi 0, %s89
      %s104 = sphi 0, %s90
      %s108 = sphi 0, %s108
      %s110 = sphi 0, %s108
      %s111 = sphi 0, %s110
      %s125 = sphi 0, %s111
      %s131 = sphi 0, %s133
      %s134 = sphi 0, %s131
      %s135 = sphi 0, %s134
      %s151 = sphi 0, %s135
    $region4: #{concept_branch.1} parent=1 // loop_header_branch
      %14 = sbr.rel (%p12) target = $region8
    $region5: #{concept_branch.1} parent=1 // loop_body
      %s16 = ssub.s32 %s11, 1
      %s17 = ssub.s32 %s11, 2
      %s18 = sadd.s32 %s11, 1
      %s19 = ssub.s32 %s11, %s18
      %p20 = scmp.eq.s32.totalorder %s19, 0
      %s22 = sadd.s32 %s21, 1
      %s23 = scalar_select %p20, %s21, %s22
      %p26 = pneg %p20
      %p27 = scmp.eq.s32.totalorder %s11, 1
      %p28 = por %p26, %p27
      %p29 = scmp.ne.s32.totalorder %s21, %s24
      %p30 = scmp.eq.s32.totalorder %s11, 0
      %p31 = por %p29, %p30
      %p32 = scmp.ne.s32.totalorder %s21, %s24
      %p33 = scmp.eq.s32.totalorder %s16, 1
      %p34 = por %p32, %p33
      %p35 = scmp.ne.s32.totalorder %s24, %s25
      %p36 = scmp.eq.s32.totalorder %s16, 0
      %p37 = por %p35, %p36
      %p38 = scmp.ne.s32.totalorder %s24, %s25
      %p39 = scmp.eq.s32.totalorder %s17, 1
      %p40 = por %p38, %p39
      %p42 = scmp.ne.s32.totalorder %s25, %s41
      %p43 = scmp.eq.s32.totalorder %s17, 0
      %p44 = por %p42, %p43
      %s46 = sadd.s32 %s45, 1
      %p49 = scmp.eq.s32.totalorder %s11, 1
      %p50 = scmp.ne.s32.totalorder %s45, %s47
      %p51 = scmp.eq.s32.totalorder %s11, 0
      %p52 = por %p50, %p51
      %p53 = scmp.ne.s32.totalorder %s45, %s47
      %p54 = scmp.eq.s32.totalorder %s16, 1
      %p55 = por %p53, %p54
      %p56 = scmp.ne.s32.totalorder %s47, %s48
      %p57 = scmp.eq.s32.totalorder %s16, 0
      %p58 = por %p56, %p57
      %p59 = scmp.ne.s32.totalorder %s47, %s48
      %p60 = scmp.eq.s32.totalorder %s17, 1
      %p61 = por %p59, %p60
      %p63 = scmp.ne.s32.totalorder %s48, %s62
      %p64 = scmp.eq.s32.totalorder %s17, 0
      %p65 = por %p63, %p64
      %s67 = sadd.s32 %s66, 1
      %p70 = scmp.eq.s32.totalorder %s11, 1
      %p71 = scmp.ne.s32.totalorder %s66, %s68
      %p72 = scmp.eq.s32.totalorder %s11, 0
      %p73 = por %p71, %p72
      %p74 = scmp.ne.s32.totalorder %s66, %s68
      %p75 = scmp.eq.s32.totalorder %s16, 1
      %p76 = por %p74, %p75
      %p77 = scmp.ne.s32.totalorder %s68, %s69
      %p78 = scmp.eq.s32.totalorder %s16, 0
      %p79 = por %p77, %p78
      %p80 = scmp.ne.s32.totalorder %s68, %s69
      %p81 = scmp.eq.s32.totalorder %s17, 1
      %p82 = por %p80, %p81
      %p84 = scmp.ne.s32.totalorder %s69, %s83
      %p85 = scmp.eq.s32.totalorder %s17, 0
      %p86 = por %p84, %p85
      %s88 = sadd.s32 %s87, 1
      %p91 = scmp.eq.s32.totalorder %s11, 1
      %p92 = scmp.ne.s32.totalorder %s87, %s89
      %p93 = scmp.eq.s32.totalorder %s11, 0
      %p94 = por %p92, %p93
      %p95 = scmp.ne.s32.totalorder %s87, %s89
      %p96 = scmp.eq.s32.totalorder %s16, 1
      %p97 = por %p95, %p96
      %p98 = scmp.ne.s32.totalorder %s89, %s90
      %p99 = scmp.eq.s32.totalorder %s16, 0
      %p100 = por %p98, %p99
      %p101 = scmp.ne.s32.totalorder %s89, %s90
      %p102 = scmp.eq.s32.totalorder %s17, 1
      %p103 = por %p101, %p102
      %p105 = scmp.ne.s32.totalorder %s90, %s104
      %p106 = scmp.eq.s32.totalorder %s17, 0
      %p107 = por %p105, %p106
      %s109 = sadd.s32 %s108, 1
      %p112 = scmp.eq.s32.totalorder %s11, 1
      %p113 = scmp.ne.s32.totalorder %s108, %s110
      %p114 = scmp.eq.s32.totalorder %s11, 0
      %p115 = por %p113, %p114
      %p116 = scmp.ne.s32.totalorder %s108, %s110
      %p117 = scmp.eq.s32.totalorder %s16, 1
      %p118 = por %p116, %p117
      %p119 = scmp.ne.s32.totalorder %s110, %s111
      %p120 = scmp.eq.s32.totalorder %s16, 0
      %p121 = por %p119, %p120
      %p122 = scmp.ne.s32.totalorder %s110, %s111
      %p123 = scmp.eq.s32.totalorder %s17, 1
      %p124 = por %p122, %p123
      %p126 = scmp.ne.s32.totalorder %s111, %s125
      %p127 = scmp.eq.s32.totalorder %s17, 0
      %p128 = por %p126, %p127
      %s129 = ssub.s32 %s11, %s18
      %p130 = scmp.eq.s32.totalorder %s129, 0
      %s132 = sadd.s32 %s131, 1
      %s133 = scalar_select %p130, %s131, %s132
      %p136 = pneg %p130
      %p137 = scmp.eq.s32.totalorder %s11, 1
      %p138 = por %p136, %p137
      %p139 = scmp.ne.s32.totalorder %s131, %s134
      %p140 = scmp.eq.s32.totalorder %s11, 0
      %p141 = por %p139, %p140
      %p142 = scmp.ne.s32.totalorder %s131, %s134
      %p143 = scmp.eq.s32.totalorder %s16, 1
      %p144 = por %p142, %p143
      %p145 = scmp.ne.s32.totalorder %s134, %s135
      %p146 = scmp.eq.s32.totalorder %s16, 0
      %p147 = por %p145, %p146
      %p148 = scmp.ne.s32.totalorder %s134, %s135
      %p149 = scmp.eq.s32.totalorder %s17, 1
      %p150 = por %p148, %p149
      %p152 = scmp.ne.s32.totalorder %s135, %s151
      %p153 = scmp.eq.s32.totalorder %s17, 0
      %p154 = por %p152, %p153
      %p155 = scmp.le.s32.totalorder 1, %s11
      %p156 = scmp.lt.s32.totalorder %s11, 3
      %p157 = pnand %p155, %p156
      %p158 = pneg %p157
      // Predicated region
      $region9: #{concept_branch.1} parent=5 // pred_check
        _
      $region10: #{concept_branch.1} parent=5 // pred_check_branch
        %160 = sbr.rel (%p157) target = $region12
      $region11: #{concept_branch.1} parent=5 // pred_region
        %s161 = ssub.s32 %s11, 1
        // Predicated region
        $region13: #{concept_branch.1} parent=11 // pred_check
          %p162 = pneg %p58
        $region14: #{concept_branch.1} parent=11 // pred_check_branch
          %164 = sbr.rel (%p162) target = $region16
        $region15: #{concept_branch.1} parent=11 // pred_region
          _
        $region16: #{concept_branch.1} parent=11 // pred_fallthru
          _
        // Predicated region
        $region17: #{concept_branch.1} parent=11 // pred_check
          %p165 = pneg %p79
        $region18: #{concept_branch.1} parent=11 // pred_check_branch
          %167 = sbr.rel (%p165) target = $region20
        $region19: #{concept_branch.1} parent=11 // pred_region
          _
        $region20: #{concept_branch.1} parent=11 // pred_fallthru
          _
        // Predicated region
        $region21: #{concept_branch.1} parent=11 // pred_check
          %p168 = pneg %p100
        $region22: #{concept_branch.1} parent=11 // pred_check_branch
          %170 = sbr.rel (%p168) target = $region24
        $region23: #{concept_branch.1} parent=11 // pred_region
          _
        $region24: #{concept_branch.1} parent=11 // pred_fallthru
          _
        // Predicated region
        $region25: #{concept_branch.1} parent=11 // pred_check
          %p171 = pneg %p121
        $region26: #{concept_branch.1} parent=11 // pred_check_branch
          %173 = sbr.rel (%p171) target = $region28
        $region27: #{concept_branch.1} parent=11 // pred_region
          _
        $region28: #{concept_branch.1} parent=11 // pred_fallthru
          _
      $region12: #{concept_branch.1} parent=5 // pred_fallthru
        _
      %p174 = scmp.lt.s32.totalorder %s11, 2
      // Predicated region
      $region29: #{concept_branch.1} parent=5 // pred_check
        %p175 = pneg %p174
      $region30: #{concept_branch.1} parent=5 // pred_check_branch
        %177 = sbr.rel (%p175) target = $region32
      $region31: #{concept_branch.1} parent=5 // pred_region
        // Predicated region
        $region33: #{concept_branch.1} parent=31 // pred_check
          %p178 = pneg %p31
        $region34: #{concept_branch.1} parent=31 // pred_check_branch
          %180 = sbr.rel (%p178) target = $region36
        $region35: #{concept_branch.1} parent=31 // pred_region
          %s181 = sand.u32 %s21, 1
          %s182 = sand.u32 %s21, 1
          %s183 = smul.addr %s182, 32
          %s184 = scalar_lea.vmem [#allocation2], %s183
          %s185 = smul.addr %s11, 4
          %s186 = scalar_lea.vmem %s0, %s185
          // Predicated region
          $region37: #{concept_branch.1} parent=35 // pred_check
            _
          $region38: #{concept_branch.1} parent=35 // pred_check_branch
            %188 = sbr.rel (0) target = $region40
          $region39: #{concept_branch.1} parent=35 // pred_region
            // Predicated region
            $region41: #{concept_branch.1} parent=39 // pred_check
              _
            $region42: #{concept_branch.1} parent=39 // pred_check_branch
              %190 = sbr.rel target = $region44
            $region43: #{concept_branch.1} parent=39 // pred_region
              // Predicated region
              $region56: #{concept_branch.1} parent=43 // pred_check
                _
              $region57: #{concept_branch.1} parent=43 // pred_check_branch
                %219 = sbr.rel (0) target = $region59
              $region58: #{concept_branch.1} parent=43 // pred_region
                loop: start=0, step=1, limit=1
                $region60: #{concept_branch.1} parent=58 // loop_pre_header
                  _
                $region61: #{concept_branch.1} parent=58 // loop_header
                  %s221 = sphi 0, %s225
                  %p222 = scmp.ge.s32.totalorder %s221, 1
                  %s226 = sphi %s186, %s186
                  %s227 = sphi %s184, %s184
                $region62: #{concept_branch.1} parent=58 // loop_header_branch
                  %224 = sbr.rel (%p222) target = $region66
                $region63: #{concept_branch.1} parent=58 // loop_body
                  _
                $region64: #{concept_branch.1} parent=58 // loop_footer
                  %s225 = sadd.s32 1, %s221
                $region65: #{concept_branch.1} parent=58 // loop_footer_branch
                  %220 = sbr.rel target = $region61
                $region66: #{concept_branch.1} parent=58 // loop_exit
                  _
                loop: start=0, step=1, limit=1
                $region67: #{concept_branch.1} parent=58 // loop_pre_header
                  _
                $region68: #{concept_branch.1} parent=58 // loop_header
                  %s230 = sphi 0, %s234
                  %p231 = scmp.ge.s32.totalorder %s230, 1
                  %s235 = sphi %s186, %s186
                  %s236 = sphi %s184, %s184
                $region69: #{concept_branch.1} parent=58 // loop_header_branch
                  %233 = sbr.rel (%p231) target = $region73
                $region70: #{concept_branch.1} parent=58 // loop_body
                  %v237 = vld [vmem:[%s235] sm:$0xf]
                  %238 = vst [vmem:[%s236] sm:$0xf] %v237
                  %v239 = vld [vmem:[%s235 + $0x8] sm:$0xf]
                  %240 = vst [vmem:[%s236 + $0x4] sm:$0xf] %v239
                  %v241 = vld [vmem:[%s235 + $0x10] sm:$0xf]
                  %242 = vst [vmem:[%s236 + $0x8] sm:$0xf] %v241
                  %v243 = vld [vmem:[%s235 + $0x18] sm:$0xf]
                  %244 = vst [vmem:[%s236 + $0xc] sm:$0xf] %v243
                  %v245 = vld [vmem:[%s235 + $0x20] sm:$0xf]
                  %246 = vst [vmem:[%s236 + $0x10] sm:$0xf] %v245
                  %v247 = vld [vmem:[%s235 + $0x28] sm:$0xf]
                  %248 = vst [vmem:[%s236 + $0x14] sm:$0xf] %v247
                  %v249 = vld [vmem:[%s235 + $0x30] sm:$0xf]
                  %250 = vst [vmem:[%s236 + $0x18] sm:$0xf] %v249
                  %v251 = vld [vmem:[%s235 + $0x38] sm:$0xf]
                  %252 = vst [vmem:[%s236 + $0x1c] sm:$0xf] %v251
                $region71: #{concept_branch.1} parent=58 // loop_footer
                  %s234 = sadd.s32 1, %s230
                $region72: #{concept_branch.1} parent=58 // loop_footer_branch
                  %229 = sbr.rel target = $region68
                $region73: #{concept_branch.1} parent=58 // loop_exit
                  _
              $region59: #{concept_branch.1} parent=43 // pred_fallthru
                _
            $region44: #{concept_branch.1} parent=39 // pred_fallthru
              _
            // Predicated region
            $region45: #{concept_branch.1} parent=39 // pred_check
              _
            $region46: #{concept_branch.1} parent=39 // pred_check_branch
              %192 = sbr.rel (0) target = $region48
            $region47: #{concept_branch.1} parent=39 // pred_region
              loop: start=0, step=1, limit=1
              $region49: #{concept_branch.1} parent=47 // loop_pre_header
                _
              $region50: #{concept_branch.1} parent=47 // loop_header
                %s195 = sphi 0, %s199
                %p196 = scmp.ge.s32.totalorder %s195, 1
                %s200 = sphi %s186, %s186
                %s201 = sphi %s184, %s184
              $region51: #{concept_branch.1} parent=47 // loop_header_branch
                %198 = sbr.rel (%p196) target = $region55
              $region52: #{concept_branch.1} parent=47 // loop_body
                %v202 = vld [vmem:[%s200] sm:$0xf]
                %203 = vst [vmem:[%s201] sm:$0xf] %v202
                %v204 = vld [vmem:[%s200 + $0x8] sm:$0xf]
                %205 = vst [vmem:[%s201 + $0x4] sm:$0xf] %v204
                %v206 = vld [vmem:[%s200 + $0x10] sm:$0xf]
                %207 = vst [vmem:[%s201 + $0x8] sm:$0xf] %v206
                %v208 = vld [vmem:[%s200 + $0x18] sm:$0xf]
                %209 = vst [vmem:[%s201 + $0xc] sm:$0xf] %v208
                %v210 = vld [vmem:[%s200 + $0x20] sm:$0xf]
                %211 = vst [vmem:[%s201 + $0x10] sm:$0xf] %v210
                %v212 = vld [vmem:[%s200 + $0x28] sm:$0xf]
                %213 = vst [vmem:[%s201 + $0x14] sm:$0xf] %v212
                %v214 = vld [vmem:[%s200 + $0x30] sm:$0xf]
                %215 = vst [vmem:[%s201 + $0x18] sm:$0xf] %v214
                %v216 = vld [vmem:[%s200 + $0x38] sm:$0xf]
                %217 = vst [vmem:[%s201 + $0x1c] sm:$0xf] %v216
              $region53: #{concept_branch.1} parent=47 // loop_footer
                %s199 = sadd.s32 1, %s195
              $region54: #{concept_branch.1} parent=47 // loop_footer_branch
                %194 = sbr.rel target = $region50
              $region55: #{concept_branch.1} parent=47 // loop_exit
                _
            $region48: #{concept_branch.1} parent=39 // pred_fallthru
              _
          $region40: #{concept_branch.1} parent=35 // pred_fallthru
            _
          %253 = vnop
        $region36: #{concept_branch.1} parent=31 // pred_fallthru
          _
      $region32: #{concept_branch.1} parent=5 // pred_fallthru
        _
      %p254 = scmp.le.s32.totalorder 1, %s11
      %p255 = scmp.lt.s32.totalorder %s11, 3
      %p256 = pnand %p254, %p255
      %p257 = pneg %p256
      // Predicated region
      $region74: #{concept_branch.1} parent=5 // pred_check
        _
      $region75: #{concept_branch.1} parent=5 // pred_check_branch
        %259 = sbr.rel (%p256) target = $region77
      $region76: #{concept_branch.1} parent=5 // pred_region
        %s260 = ssub.s32 %s11, 1
        %s261 = sand.u32 %s24, 1
        %s262 = sand.u32 %s24, 1
        %s263 = smul.addr %s262, 32
        %s264 = scalar_lea.vmem [#allocation2], %s263
        // Predicated region
        $region78: #{concept_branch.1} parent=76 // pred_check
          %p265 = pneg %p37
        $region79: #{concept_branch.1} parent=76 // pred_check_branch
          %267 = sbr.rel (%p265) target = $region81
        $region80: #{concept_branch.1} parent=76 // pred_region
          _
        $region81: #{concept_branch.1} parent=76 // pred_fallthru
          _
        %s268 = sand.u32 %s24, 1
        %s269 = sand.u32 %s24, 1
        %s270 = smul.addr %s269, 32
        %s271 = scalar_lea.vmem [#allocation2], %s270
        %p272 = pneg %p37
        %p273 = pneg %p34
        %p274 = pneg %p58
        %p275 = pneg %p55
        %p276 = pneg %p79
        %p277 = pneg %p76
        %p278 = pneg %p100
        %p279 = pneg %p97
        %p280 = pneg %p121
        %p281 = pneg %p118
        %p282 = pneg %p147
        %p283 = pneg %p144
        %p284 = scmp.lt.s32.totalorder %s16, 1
        %s285 = scalar_select %p284, %s16, 1
        %s286 = smul.addr %s285, 8
        %s287 = scalar_lea.vmem %s5, %s286
        %p288 = scmp.lt.s32.totalorder %s16, 1
        %s289 = scalar_select %p288, %s16, 1
        %s290 = smul.addr %s289, 8
        %s291 = scalar_lea.vmem %s5, %s290
        %v293 = vld [vmem:[%s1] sm:$0xf]
        %v294 = vld [vmem:[%s1 + $0x4] sm:$0xf]
        %v295 = vld [vmem:[%s1 + $0x8] sm:$0xf]
        %v296 = vld [vmem:[%s1 + $0xc] sm:$0xf]
        %v297 = vld [vmem:[%s264] sm:$0xf]
        %v298 = vld [vmem:[%s264 + $0x4] sm:$0xf]
        %v299 = vld [vmem:[%s264 + $0x8] sm:$0xf]
        %v300 = vld [vmem:[%s264 + $0xc] sm:$0xf]
        %v301 = vld [vmem:[%s264 + $0x10] sm:$0xf]
        %v302 = vld [vmem:[%s264 + $0x14] sm:$0xf]
        %v303 = vld [vmem:[%s264 + $0x18] sm:$0xf]
        %v304 = vld [vmem:[%s264 + $0x1c] sm:$0xf]
        %v305 = vld [vmem:[%s2] sm:$0xff]
        %v306 = vld [vmem:[%s2 + $0x8] sm:$0xff]
        %v307 = vld [vmem:[%s2 + $0x10] sm:$0xff]
        %v308 = vld [vmem:[%s2 + $0x18] sm:$0xff]
        %310 = vset.pattern.permute.xlu0 0
        %311 = vperm.xlu0 %310, %v305
        %v312 = vpop.permute.xlu0 %311
        %315 = vset.pattern.permute.xlu0 0
        %316 = vperm.xlu0 %315, %v306
        %v317 = vpop.permute.xlu0 %316
        %320 = vset.pattern.permute.xlu0 0
        %321 = vperm.xlu0 %320, %v307
        %v322 = vpop.permute.xlu0 %321
        %325 = vset.pattern.permute.xlu0 0
        %326 = vperm.xlu0 %325, %v308
        %v327 = vpop.permute.xlu0 %326
        %v333 = vunpack.c.l.b16 %v293
        %v334 = vunpack.c.l.b16 %v294
        %v335 = vunpack.c.l.b16 %v295
        %v336 = vunpack.c.l.b16 %v296
        %v337 = vpack.c.b16 %v334, %v333
        %v338 = vpack.c.b16 %v336, %v335
        %v347 = vunpack.c.l.b16 %v297
        %v348 = vunpack.c.l.b16 %v298
        %v349 = vunpack.c.l.b16 %v299
        %v350 = vunpack.c.l.b16 %v300
        %v351 = vunpack.c.l.b16 %v301
        %v352 = vunpack.c.l.b16 %v302
        %v353 = vunpack.c.l.b16 %v303
        %v354 = vunpack.c.l.b16 %v304
        %v355 = vpack.c.b16 %v348, %v347
        %v356 = vpack.c.b16 %v350, %v349
        %v357 = vpack.c.b16 %v352, %v351
        %v358 = vpack.c.b16 %v354, %v353
        %vm363 = vcmask 523264
        %v365 = vsel %vm363, %v337, 0
        %v368 = vsel %vm363, %v338, 0
        %370 = vmatprep.subr.bf16.mxu0 0
        %371 = vmatpush1.bf16.msra.mxu0 %v355
        %372 = vmatprep.subr.bf16.mxu0 0
        %373 = vmatpush1.bf16.msra.mxu0 %v356
        %374 = vmatprep.subr.bf16.mxu0 0
        %375 = vmatpush1.bf16.msra.mxu0 %v357
        %376 = vmatprep.subr.bf16.mxu0 0
        %377 = vmatpush1.bf16.msra.mxu0 %v358
        %378 = vmatprep.subr.bf16.mxu0 0
        %379 = vmatpush1.bf16.msra.mxu0 0
        %380 = vmatprep.subr.bf16.mxu0 0
        %381 = vmatpush1.bf16.msra.mxu0 0
        %382 = vmatprep.subr.bf16.mxu0 0
        %383 = vmatpush1.bf16.msra.mxu0 0
        %384 = vmatprep.subr.bf16.mxu0 0
        %385 = vmatpush1.bf16.msra.mxu0 0
        %386 = vmatprep.subr.bf16.mxu0 0
        %387 = vmatpush1.bf16.msra.mxu0 0
        %388 = vmatprep.subr.bf16.mxu0 0
        %389 = vmatpush1.bf16.msra.mxu0 0
        %390 = vmatprep.subr.bf16.mxu0 0
        %391 = vmatpush1.bf16.msra.mxu0 0
        %392 = vmatprep.subr.bf16.mxu0 0
        %393 = vmatpush1.bf16.msra.mxu0 0
        %394 = vmatprep.subr.bf16.mxu0 0
        %395 = vmatpush1.bf16.msra.mxu0 0
        %396 = vmatprep.subr.bf16.mxu0 0
        %397 = vmatpush1.bf16.msra.mxu0 0
        %398 = vmatprep.subr.bf16.mxu0 0
        %399 = vmatpush1.bf16.msra.mxu0 0
        %400 = vmatprep.subr.bf16.mxu0 0
        %401 = vmatpush1.bf16.msra.mxu0 0
        %402 = vmatprep.mubr.bf16.mxu0 0
        %403 = vmatmul.mubr.bf16.gmra.mrb[0].mxu0 %v365
        %v404 = vpop.f32.mrb[0].mxu0
        %v405 = vadd.f32 %v312, %v404
        %v406 = vpop.f32.mrb[0].mxu0
        %v407 = vpop.f32.mrb[0].mxu0
        %v408 = vadd.f32 %v317, %v407
        %v409 = vpop.f32.mrb[0].mxu0
        %410 = vmatprep.mubr.bf16.mxu0 0
        %411 = vmatmul.mubr.bf16.gmra.mrb[0].mxu0 %v368
        %v412 = vpop.f32.mrb[0].mxu0
        %v413 = vadd.f32 %v322, %v412
        %v414 = vpop.f32.mrb[0].mxu0
        %v415 = vpop.f32.mrb[0].mxu0
        %v416 = vadd.f32 %v327, %v415
        %v417 = vpop.f32.mrb[0].mxu0
        %418 = vdwg.mxu0
        %v419 = vmax.f32 %v405, 0.0
        %v420 = vmax.f32 %v408, 0.0
        %v421 = vmax.f32 %v413, 0.0
        %v422 = vmax.f32 %v416, 0.0
        %v423 = vld [vmem:[%s3] sm:$0xf]
        %v424 = vpack.c.bf16 %v420, %v419
        %v425 = vpack.c.bf16 %v422, %v421
        %v426 = vld [vmem:[%s4] sm:$0xff]
        %428 = vset.pattern.permute.xlu0 0
        %429 = vperm.xlu0 %428, %v426
        %v430 = vpop.permute.xlu0 %429
        %vm432 = vcmask 261120
        %v434 = vsel %vm432, %v423, 0
        %436 = vmatprep.subr.bf16.mxu0 0
        %437 = vmatpush1.bf16.msra.mxu0 %v424
        %438 = vmatprep.subr.bf16.mxu0 0
        %439 = vmatpush1.bf16.msra.mxu0 %v425
        %440 = vmatprep.subr.bf16.mxu0 0
        %441 = vmatpush1.bf16.msra.mxu0 0
        %442 = vmatprep.subr.bf16.mxu0 0
        %443 = vmatpush1.bf16.msra.mxu0 0
        %444 = vmatprep.subr.bf16.mxu0 0
        %445 = vmatpush1.bf16.msra.mxu0 0
        %446 = vmatprep.subr.bf16.mxu0 0
        %447 = vmatpush1.bf16.msra.mxu0 0
        %448 = vmatprep.subr.bf16.mxu0 0
        %449 = vmatpush1.bf16.msra.mxu0 0
        %450 = vmatprep.subr.bf16.mxu0 0
        %451 = vmatpush1.bf16.msra.mxu0 0
        %452 = vmatprep.subr.bf16.mxu0 0
        %453 = vmatpush1.bf16.msra.mxu0 0
        %454 = vmatprep.subr.bf16.mxu0 0
        %455 = vmatpush1.bf16.msra.mxu0 0
        %456 = vmatprep.subr.bf16.mxu0 0
        %457 = vmatpush1.bf16.msra.mxu0 0
        %458 = vmatprep.subr.bf16.mxu0 0
        %459 = vmatpush1.bf16.msra.mxu0 0
        %460 = vmatprep.subr.bf16.mxu0 0
        %461 = vmatpush1.bf16.msra.mxu0 0
        %462 = vmatprep.subr.bf16.mxu0 0
        %463 = vmatpush1.bf16.msra.mxu0 0
        %464 = vmatprep.subr.bf16.mxu0 0
        %465 = vmatpush1.bf16.msra.mxu0 0
        %466 = vmatprep.subr.bf16.mxu0 0
        %467 = vmatpush1.bf16.msra.mxu0 0
        %468 = vmatprep.mubr.bf16.mxu0 0
        %469 = vmatmul.mubr.bf16.gmra.mrb[0].mxu0 %v434
        %v470 = vpop.f32.mrb[0].mxu0
        %v471 = vadd.f32 %v430, %v470
        %v472 = vpop.f32.mrb[0].mxu0
        %v473 = vpop.f32.mrb[0].mxu0
        %v474 = vpop.f32.mrb[0].mxu0
        %475 = vdwg.mxu0
        %v476 = vrot.slane %v471, 4
        %v477 = vmax.f32 %v471, %v476
        %v478 = vrot.slane %v477, 2
        %v479 = vmax.f32 %v477, %v478
        %v480 = vrot.slane %v479, 1
        %v481 = vmax.f32 %v479, %v480
        %v482 = vsub.f32 %v471, %v481
        %v483 = vmul.f32 %v482, 1.442695
        %v484 = vpow.pop %v483
        %v485 = vrot.slane %v484, 4
        %v486 = vadd.f32 %v484, %v485
        %v487 = vrot.slane %v486, 2
        %v488 = vadd.f32 %v486, %v487
        %v489 = vrot.slane %v488, 1
        %v490 = vadd.f32 %v488, %v489
        %v491 = vrcp.pop %v490
        %v492 = vmul.f32 1.0, %v491
        %v493 = vmul.f32 %v484, %v492
        %494 = vst [vmem:[%s291] sm:$0xff] %v493
        %p495 = scmp.lt.s32.totalorder %s16, 1
        %s496 = scalar_select %p495, %s16, 1
        %s497 = smul.addr %s496, 8
        %s498 = scalar_lea.vmem %s5, %s497
        // Predicated region
        $region82: #{concept_branch.1} parent=76 // pred_check
          %p499 = pneg %p144
        $region83: #{concept_branch.1} parent=76 // pred_check_branch
          %501 = sbr.rel (%p499) target = $region85
        $region84: #{concept_branch.1} parent=76 // pred_region
          _
        $region85: #{concept_branch.1} parent=76 // pred_fallthru
          _
      $region77: #{concept_branch.1} parent=5 // pred_fallthru
        _
      %p502 = scmp.le.s32.totalorder 2, %s11
      // Predicated region
      $region86: #{concept_branch.1} parent=5 // pred_check
        %p503 = pneg %p502
      $region87: #{concept_branch.1} parent=5 // pred_check_branch
        %505 = sbr.rel (%p503) target = $region89
      $region88: #{concept_branch.1} parent=5 // pred_region
        %s506 = ssub.s32 %s11, 2
        // Predicated region
        $region90: #{concept_branch.1} parent=88 // pred_check
          %p507 = pneg %p150
        $region91: #{concept_branch.1} parent=88 // pred_check_branch
          %509 = sbr.rel (%p507) target = $region93
        $region92: #{concept_branch.1} parent=88 // pred_region
          %p510 = scmp.lt.s32.totalorder %s17, 1
          %s511 = scalar_select %p510, %s17, 1
          %s512 = smul.addr %s511, 8
          %s513 = scalar_lea.vmem %s5, %s512
        $region93: #{concept_branch.1} parent=88 // pred_fallthru
          _
      $region89: #{concept_branch.1} parent=5 // pred_fallthru
        _
    $region6: #{concept_branch.1} parent=1 // loop_footer
      %s15 = sadd.s32 1, %s11
    $region7: #{concept_branch.1} parent=1 // loop_footer_branch
      %10 = sbr.rel target = $region3
    $region8: #{concept_branch.1} parent=1 // loop_exit
      _

</llo_original>
